<compile_context>
chip_gen: v5e
topology: v5e:2x2
jax: 0.10.0
libtpu: 0.0.40
codegen_flags: <defaults>
</compile_context>

<pallas_src>
import functools
import numpy as np
import jax
import jax.numpy as jnp
from jax.experimental import pallas as pl
from jax.experimental.pallas import tpu as pltpu

EPS = 1e-5  # PyTorch LayerNorm default eps


# ----------------------------------------------------------------------------
# Math helpers
# ----------------------------------------------------------------------------
def _gelu_exact(x):
    # PyTorch nn.GELU() default (exact erf form).
    return 0.5 * x * (1.0 + jax.lax.erf(x * (1.0 / np.sqrt(2.0))))


def _gelu(x, approximate):
    if approximate:
        # tanh form — executes in the EUP slot, leaving the VALU for LN/FiLM math.
        return jax.nn.gelu(x, approximate=True)
    return _gelu_exact(x)


def _layernorm(x, w, b):
    # Two-pass LayerNorm (matches PyTorch; avoids E[x^2]-E[x]^2 cancellation).
    mu = jnp.mean(x, axis=-1, keepdims=True)
    xc = x - mu
    var = jnp.mean(xc * xc, axis=-1, keepdims=True)
    return xc * (jax.lax.rsqrt(var + EPS) * w) + b


# ----------------------------------------------------------------------------
# Kernel
# ----------------------------------------------------------------------------
def _film_kernel(hg_ref, hc_ref,
                 lng_w_ref, lng_b_ref, lnc_w_ref, lnc_b_ref,
                 wg_ref, wc_ref, wp_ref,
                 ln2_w_ref, ln2_b_ref,
                 out_ref, *, d, approximate_gelu):
    f32 = jnp.float32
    hg_n = _layernorm(hg_ref[...].astype(f32), lng_w_ref[...], lng_b_ref[...])
    hc_n = _layernorm(hc_ref[...].astype(f32), lnc_w_ref[...], lnc_b_ref[...])
    # bf16 MXU operands, f32 accumulation; elementwise math stays f32 (v5e-safe).
    hg_mx = hg_n.astype(jnp.bfloat16)
    hc_mx = hc_n.astype(jnp.bfloat16)

    # ---- g-stream first: gamma_g/beta_g/h_mod_g die before the c-stream starts ----
    gb_g = jnp.dot(hc_mx, wg_ref[...], preferred_element_type=f32)      # (tm, 2d)
    h_mod_g = gb_g[:, :d] * hg_n + gb_g[:, d:]
    a_g = _gelu(h_mod_g, approximate_gelu).astype(jnp.bfloat16)

    # ---- c-stream ----
    gb_c = jnp.dot(hg_mx, wc_ref[...], preferred_element_type=f32)      # (tm, 2d)
    h_mod_c = gb_c[:, :d] * hc_n + gb_c[:, d:]
    a_c = _gelu(h_mod_c, approximate_gelu).astype(jnp.bfloat16)

    # proj(cat([h_mod_g, h_mod_c])): one full-width K=2d MXU GEMM.
    y = jnp.dot(jnp.concatenate([a_g, a_c], axis=-1), wp_ref[...],
                preferred_element_type=f32)

    out_ref[...] = _layernorm(y, ln2_w_ref[...], ln2_b_ref[...]).astype(out_ref.dtype)


# ----------------------------------------------------------------------------
# Host-side helpers
# ----------------------------------------------------------------------------
def _round_up(x, m):
    return (x + m - 1) // m * m


def _default_tm(m, d):
    dout = 2 * d
    # Per-row VMEM bytes: double-buffered in/out f32 tiles + ~12 live f32
    # temporaries of width <= 2d inside the body.
    per_row = 4 * (2 * 2 * d + 2 * dout) + 4 * 12 * dout
    budget = 24 << 20                    # leaves weight/pipeline headroom in v7x's 64 MiB
    cap = int(min(1024, max(64, (budget // per_row) // 64 * 64)))
    if m >= 2 * cap:
        return cap
    # Small/medium M: keep >= 2 grid steps (v7x's two TensorCores + DMA/compute
    # overlap), but never below the 8-sublane grain.
    return int(min(cap, _round_up(max(-(-m // 2), 8), 8)))


def _vmem_limit_bytes(tm, d):
    dout = 2 * d
    f32, bf16 = 4, 2
    w_bytes = (2 * d * dout + dout * dout) * bf16
    ln_bytes = (4 * d + 2 * dout) * f32
    io_bytes = 2 * (2 * tm * d + tm * dout) * f32       # double-buffered row tiles
    temp_bytes = 12 * tm * dout * f32                   # live f32 temporaries
    needed = 2 * (w_bytes + ln_bytes) + io_bytes + temp_bytes
    try:
        cap = pltpu.get_tpu_info().vmem_capacity_bytes   # v7x: 64 MiB, v5e/v6e: 128 MiB
    except Exception:
        cap = 64 << 20                                   # safe lower bound
    return int(min(max(int(1.3 * needed), 32 << 20), int(0.9 * cap)))


def _film_forward(h_g, h_c, prepared, d, approximate_gelu, out_dtype, tm):
    M = h_g.shape[0]
    dout = 2 * d
    if tm is None:
        tm = _default_tm(M, d)
    else:
        tm = _round_up(int(tm), 8)
    tm = max(8, min(tm, _round_up(M, 8)))
    grid = (pl.cdiv(M, tm),)             # ragged last tile: OOB reads garbage rows,
                                         # their writes are dropped (rows independent).

    row_in = pl.BlockSpec((tm, d), lambda i: (i, 0))
    row_out = pl.BlockSpec((tm, dout), lambda i: (i, 0))

    def full(shape):                     # grid-invariant weight block (DMA'd once)
        return pl.BlockSpec(shape, lambda i: (0, 0))

    lng_w, lng_b, lnc_w, lnc_b, wg, wc, wp, ln2_w, ln2_b = prepared
    in_specs = [
        row_in, row_in,                                   # h_g, h_c row tiles
        full((1, d)), full((1, d)),                       # norm_g weight, bias
        full((1, d)), full((1, d)),                       # norm_c weight, bias
        full((d, dout)), full((d, dout)),                 # gamma_beta_g, gamma_beta_c
        full((dout, dout)),                               # proj
        full((1, dout)), full((1, dout)),                 # norm2 weight, bias
    ]

    kernel = functools.partial(_film_kernel, d=d, approximate_gelu=approximate_gelu)
    return pl.pallas_call(
        kernel,
        out_shape=jax.ShapeDtypeStruct((M, dout), out_dtype),
        grid_spec=pltpu.PrefetchScalarGridSpec(
            num_scalar_prefetch=0,
            grid=grid,
            in_specs=in_specs,
            out_specs=row_out,
        ),
        compiler_params=pltpu.CompilerParams(
            dimension_semantics=("parallel",),
            vmem_limit_bytes=_vmem_limit_bytes(tm, d),
        ),
    )(h_g, h_c, lng_w, lng_b, lnc_w, lnc_b, wg, wc, wp, ln2_w, ln2_b)


def make_bidirectional_film_fusion(params, *, approximate_gelu=True,
                                   out_dtype=jnp.float32, tm=None):
    """Build the fused forward once and return a cached, jitted callable.

    params = (lng_w, lng_b, lnc_w, lnc_b, wg, wc, wp, ln2_w, ln2_b), with Linear
    weights as (in_features, out_features) (transpose of nn.Linear.weight).
    Weight prep (bf16 cast, (1, n) LN vectors) runs exactly once here."""
    d = int(np.asarray(params[0]).shape[-1])

    def vec(v):
        return jnp.asarray(v, jnp.float32).reshape(1, -1)

    def mat(w, shape):
        w = jnp.asarray(w, jnp.float32)
        assert w.shape == shape, (w.shape, shape)
        return w.astype(jnp.bfloat16)          # MXU operand dtype; accumulation is f32

    prepared = (
        vec(params[0]), vec(params[1]), vec(params[2]), vec(params[3]),
        mat(params[4], (d, 2 * d)), mat(params[5], (d, 2 * d)),
        mat(params[6], (2 * d, 2 * d)),
        vec(params[7]), vec(params[8]),
    )

    @jax.jit
    def fwd(h_g, h_c):
        assert h_g.shape == h_c.shape and h_g.shape[-1] == d
        lead = h_g.shape[:-1]
        m = int(np.prod(lead)) if lead else 1
        out = _film_forward(h_g.reshape(m, d), h_c.reshape(m, d),
                            prepared, d, approximate_gelu, out_dtype, tm)
        return out.reshape(*lead, 2 * d)

    return fwd


# ----------------------------------------------------------------------------
# Pure-JAX reference (mirrors the PyTorch module)
# ----------------------------------------------------------------------------
def _reference(h_g, h_c, params, *, matmul_dtype=None, approximate_gelu=False):
    lng_w, lng_b, lnc_w, lnc_b, wg, wc, wp, ln2_w, ln2_b = params
    d = h_g.shape[-1]

    def mm(a, w):
        if matmul_dtype is not None:
            a = a.astype(matmul_dtype)
            w = w.astype(matmul_dtype)
        return jnp.dot(a, w, preferred_element_type=jnp.float32)

    hg_n = _layernorm(h_g, lng_w, lng_b)
    hc_n = _layernorm(h_c, lnc_w, lnc_b)
    gb_g = mm(hc_n, wg)
    gb_c = mm(hg_n, wc)
    h_mod_g = gb_g[:, :d] * hg_n + gb_g[:, d:]
    h_mod_c = gb_c[:, :d] * hc_n + gb_c[:, d:]
    cat = jnp.concatenate([h_mod_g, h_mod_c], axis=-1)
    y = mm(_gelu(cat, approximate_gelu), wp)
    return _layernorm(y, ln2_w, ln2_b)


if __name__ == "__main__":
    batch, seq, d = 2, 8, 32
    M = batch * seq
    dout = 2 * d

    key = jax.random.PRNGKey(0)
    keys = jax.random.split(key, 5)

    h_g = jax.random.normal(keys[0], (M, d), dtype=jnp.float32)
    h_c = jax.random.normal(keys[1], (M, d), dtype=jnp.float32)

    # PyTorch-style init: LayerNorm weight=1 / bias=0; Linear weights small random,
    # stored here as (in_features, out_features).
    lng_w = jnp.ones((d,), jnp.float32)
    lng_b = jnp.zeros((d,), jnp.float32)
    lnc_w = jnp.ones((d,), jnp.float32)
    lnc_b = jnp.zeros((d,), jnp.float32)
    wg = jax.random.normal(keys[2], (d, dout), jnp.float32) * (1.0 / np.sqrt(d))
    wc = jax.random.normal(keys[3], (d, dout), jnp.float32) * (1.0 / np.sqrt(d))
    wp = jax.random.normal(keys[4], (dout, dout), jnp.float32) * (1.0 / np.sqrt(dout))
    ln2_w = jnp.ones((dout,), jnp.float32)
    ln2_b = jnp.zeros((dout,), jnp.float32)

    params = (lng_w, lng_b, lnc_w, lnc_b, wg, wc, wp, ln2_w, ln2_b)

    fwd = make_bidirectional_film_fusion(params)   # default: tanh-approx GELU
    out = jax.block_until_ready(fwd(h_g, h_c))
    assert out.shape == (M, dout)

    # Tight check: reference emulating the kernel (bf16 MXU operands, tanh GELU).
    ref_kernel_like = _reference(h_g, h_c, params,
                                 matmul_dtype=jnp.bfloat16, approximate_gelu=True)
    np.testing.assert_allclose(np.asarray(out), np.asarray(ref_kernel_like),
                               atol=2e-2, rtol=2e-2)

    # Semantic check: full-f32, exact-erf PyTorch-equivalent reference (looser).
    ref_f32 = _reference(h_g, h_c, params, matmul_dtype=None, approximate_gelu=False)
    np.testing.assert_allclose(np.asarray(out), np.asarray(ref_f32),
                               atol=6e-2, rtol=6e-2)

    print("KERNEL_OK")
</pallas_src>

<mosaic_0001>
module attributes {stable_mosaic.version = 11 : i64} {
  func.func @_film_kernel(%arg0: i32, %arg1: memref<8x32xf32, #tpu.memory_space<vmem>>, %arg2: memref<8x32xf32, #tpu.memory_space<vmem>>, %arg3: memref<1x32xf32, #tpu.memory_space<vmem>>, %arg4: memref<1x32xf32, #tpu.memory_space<vmem>>, %arg5: memref<1x32xf32, #tpu.memory_space<vmem>>, %arg6: memref<1x32xf32, #tpu.memory_space<vmem>>, %arg7: memref<32x64xbf16, #tpu.memory_space<vmem>>, %arg8: memref<32x64xbf16, #tpu.memory_space<vmem>>, %arg9: memref<64x64xbf16, #tpu.memory_space<vmem>>, %arg10: memref<1x64xf32, #tpu.memory_space<vmem>>, %arg11: memref<1x64xf32, #tpu.memory_space<vmem>>, %arg12: memref<8x64xf32, #tpu.memory_space<vmem>>) attributes {dimension_semantics = [#tpu.dimension_semantics<parallel>], iteration_bounds = array<i64: 2>, scalar_prefetch = 0 : i64, scratch_operands = 0 : i64, tpu.core_type = #tpu.core_type<tc>, window_params = [{transform_indices = @transform_0, window_bounds = array<i64: 8, 32>}, {transform_indices = @transform_1, window_bounds = array<i64: 8, 32>}, {pipeline_mode = #tpu.pipeline_mode<synchronous>, transform_indices = @transform_2, window_bounds = array<i64: 1, 32>}, {pipeline_mode = #tpu.pipeline_mode<synchronous>, transform_indices = @transform_3, window_bounds = array<i64: 1, 32>}, {pipeline_mode = #tpu.pipeline_mode<synchronous>, transform_indices = @transform_4, window_bounds = array<i64: 1, 32>}, {pipeline_mode = #tpu.pipeline_mode<synchronous>, transform_indices = @transform_5, window_bounds = array<i64: 1, 32>}, {pipeline_mode = #tpu.pipeline_mode<synchronous>, transform_indices = @transform_6, window_bounds = array<i64: 32, 64>}, {pipeline_mode = #tpu.pipeline_mode<synchronous>, transform_indices = @transform_7, window_bounds = array<i64: 32, 64>}, {pipeline_mode = #tpu.pipeline_mode<synchronous>, transform_indices = @transform_8, window_bounds = array<i64: 64, 64>}, {pipeline_mode = #tpu.pipeline_mode<synchronous>, transform_indices = @transform_9, window_bounds = array<i64: 1, 64>}, {pipeline_mode = #tpu.pipeline_mode<synchronous>, transform_indices = @transform_10, window_bounds = array<i64: 1, 64>}, {transform_indices = @transform_11, window_bounds = array<i64: 8, 64>}]} {
    %c0 = arith.constant 0 : index
    %c0_0 = arith.constant 0 : index
    %0 = vector.load %arg1[%c0, %c0_0] : memref<8x32xf32, #tpu.memory_space<vmem>>, vector<8x32xf32>
    %c0_1 = arith.constant 0 : index
    %c0_2 = arith.constant 0 : index
    %1 = vector.load %arg3[%c0_1, %c0_2] : memref<1x32xf32, #tpu.memory_space<vmem>>, vector<1x32xf32>
    %c0_3 = arith.constant 0 : index
    %c0_4 = arith.constant 0 : index
    %2 = vector.load %arg4[%c0_3, %c0_4] : memref<1x32xf32, #tpu.memory_space<vmem>>, vector<1x32xf32>
    %cst = arith.constant dense<0.000000e+00> : vector<8xf32>
    %3 = vector.multi_reduction <add>, %0, %cst [1] : vector<8x32xf32> to vector<8xf32>
    %4 = vector.shape_cast %3 : vector<8xf32> to vector<8x1xf32>
    %cst_5 = arith.constant 3.200000e+01 : f32
    %5 = vector.broadcast %cst_5 : f32 to vector<8x1xf32>
    %6 = arith.divf %4, %5 : vector<8x1xf32>
    %7 = vector.broadcast %6 : vector<8x1xf32> to vector<8x32xf32>
    %8 = arith.subf %0, %7 : vector<8x32xf32>
    %9 = arith.mulf %8, %8 : vector<8x32xf32>
    %cst_6 = arith.constant dense<0.000000e+00> : vector<8xf32>
    %10 = vector.multi_reduction <add>, %9, %cst_6 [1] : vector<8x32xf32> to vector<8xf32>
    %11 = vector.shape_cast %10 : vector<8xf32> to vector<8x1xf32>
    %cst_7 = arith.constant 3.200000e+01 : f32
    %12 = vector.broadcast %cst_7 : f32 to vector<8x1xf32>
    %13 = arith.divf %11, %12 : vector<8x1xf32>
    %cst_8 = arith.constant 9.99999974E-6 : f32
    %14 = vector.broadcast %cst_8 : f32 to vector<8x1xf32>
    %15 = arith.addf %13, %14 : vector<8x1xf32>
    %16 = math.rsqrt %15 : vector<8x1xf32>
    %17 = vector.broadcast %16 : vector<8x1xf32> to vector<8x32xf32>
    %18 = vector.broadcast %1 : vector<1x32xf32> to vector<8x32xf32>
    %19 = arith.mulf %17, %18 : vector<8x32xf32>
    %20 = arith.mulf %8, %19 : vector<8x32xf32>
    %21 = vector.broadcast %2 : vector<1x32xf32> to vector<8x32xf32>
    %22 = arith.addf %20, %21 : vector<8x32xf32>
    %c0_9 = arith.constant 0 : index
    %c0_10 = arith.constant 0 : index
    %23 = vector.load %arg2[%c0_9, %c0_10] : memref<8x32xf32, #tpu.memory_space<vmem>>, vector<8x32xf32>
    %c0_11 = arith.constant 0 : index
    %c0_12 = arith.constant 0 : index
    %24 = vector.load %arg5[%c0_11, %c0_12] : memref<1x32xf32, #tpu.memory_space<vmem>>, vector<1x32xf32>
    %c0_13 = arith.constant 0 : index
    %c0_14 = arith.constant 0 : index
    %25 = vector.load %arg6[%c0_13, %c0_14] : memref<1x32xf32, #tpu.memory_space<vmem>>, vector<1x32xf32>
    %cst_15 = arith.constant dense<0.000000e+00> : vector<8xf32>
    %26 = vector.multi_reduction <add>, %23, %cst_15 [1] : vector<8x32xf32> to vector<8xf32>
    %27 = vector.shape_cast %26 : vector<8xf32> to vector<8x1xf32>
    %cst_16 = arith.constant 3.200000e+01 : f32
    %28 = vector.broadcast %cst_16 : f32 to vector<8x1xf32>
    %29 = arith.divf %27, %28 : vector<8x1xf32>
    %30 = vector.broadcast %29 : vector<8x1xf32> to vector<8x32xf32>
    %31 = arith.subf %23, %30 : vector<8x32xf32>
    %32 = arith.mulf %31, %31 : vector<8x32xf32>
    %cst_17 = arith.constant dense<0.000000e+00> : vector<8xf32>
    %33 = vector.multi_reduction <add>, %32, %cst_17 [1] : vector<8x32xf32> to vector<8xf32>
    %34 = vector.shape_cast %33 : vector<8xf32> to vector<8x1xf32>
    %cst_18 = arith.constant 3.200000e+01 : f32
    %35 = vector.broadcast %cst_18 : f32 to vector<8x1xf32>
    %36 = arith.divf %34, %35 : vector<8x1xf32>
    %cst_19 = arith.constant 9.99999974E-6 : f32
    %37 = vector.broadcast %cst_19 : f32 to vector<8x1xf32>
    %38 = arith.addf %36, %37 : vector<8x1xf32>
    %39 = math.rsqrt %38 : vector<8x1xf32>
    %40 = vector.broadcast %39 : vector<8x1xf32> to vector<8x32xf32>
    %41 = vector.broadcast %24 : vector<1x32xf32> to vector<8x32xf32>
    %42 = arith.mulf %40, %41 : vector<8x32xf32>
    %43 = arith.mulf %31, %42 : vector<8x32xf32>
    %44 = vector.broadcast %25 : vector<1x32xf32> to vector<8x32xf32>
    %45 = arith.addf %43, %44 : vector<8x32xf32>
    %46 = arith.truncf %22 : vector<8x32xf32> to vector<8x32xbf16>
    %47 = arith.truncf %45 : vector<8x32xf32> to vector<8x32xbf16>
    %c0_20 = arith.constant 0 : index
    %c0_21 = arith.constant 0 : index
    %48 = vector.load %arg7[%c0_20, %c0_21] : memref<32x64xbf16, #tpu.memory_space<vmem>>, vector<32x64xbf16>
    %cst_22 = arith.constant dense<0.000000e+00> : vector<8x64xf32>
    %49 = tpu.matmul %47, %48, %cst_22 {dimension_numbers = #tpu.dot_dimension_numbers<[1], [0], [0], [1], [0, 0, 1, 1], [], []>} : vector<8x32xbf16>, vector<32x64xbf16>, vector<8x64xf32> -> vector<8x64xf32>
    %50 = vector.extract_strided_slice %49 {offsets = [0, 0], sizes = [8, 32], strides = [1, 1]} : vector<8x64xf32> to vector<8x32xf32>
    %51 = arith.mulf %50, %22 : vector<8x32xf32>
    %52 = vector.extract_strided_slice %49 {offsets = [0, 32], sizes = [8, 32], strides = [1, 1]} : vector<8x64xf32> to vector<8x32xf32>
    %53 = arith.addf %51, %52 : vector<8x32xf32>
    %54 = arith.mulf %53, %53 : vector<8x32xf32>
    %55 = arith.mulf %53, %54 : vector<8x32xf32>
    %cst_23 = arith.constant 4.471500e-02 : f32
    %56 = vector.broadcast %cst_23 : f32 to vector<8x32xf32>
    %57 = arith.mulf %56, %55 : vector<8x32xf32>
    %58 = arith.addf %53, %57 : vector<8x32xf32>
    %cst_24 = arith.constant 0.797884583 : f32
    %59 = vector.broadcast %cst_24 : f32 to vector<8x32xf32>
    %60 = arith.mulf %59, %58 : vector<8x32xf32>
    %61 = math.tanh %60 : vector<8x32xf32>
    %cst_25 = arith.constant 1.000000e+00 : f32
    %62 = vector.broadcast %cst_25 : f32 to vector<8x32xf32>
    %63 = arith.addf %62, %61 : vector<8x32xf32>
    %cst_26 = arith.constant 5.000000e-01 : f32
    %64 = vector.broadcast %cst_26 : f32 to vector<8x32xf32>
    %65 = arith.mulf %64, %63 : vector<8x32xf32>
    %66 = arith.mulf %53, %65 : vector<8x32xf32>
    %67 = arith.truncf %66 : vector<8x32xf32> to vector<8x32xbf16>
    %c0_27 = arith.constant 0 : index
    %c0_28 = arith.constant 0 : index
    %68 = vector.load %arg8[%c0_27, %c0_28] : memref<32x64xbf16, #tpu.memory_space<vmem>>, vector<32x64xbf16>
    %cst_29 = arith.constant dense<0.000000e+00> : vector<8x64xf32>
    %69 = tpu.matmul %46, %68, %cst_29 {dimension_numbers = #tpu.dot_dimension_numbers<[1], [0], [0], [1], [0, 0, 1, 1], [], []>} : vector<8x32xbf16>, vector<32x64xbf16>, vector<8x64xf32> -> vector<8x64xf32>
    %70 = vector.extract_strided_slice %69 {offsets = [0, 0], sizes = [8, 32], strides = [1, 1]} : vector<8x64xf32> to vector<8x32xf32>
    %71 = arith.mulf %70, %45 : vector<8x32xf32>
    %72 = vector.extract_strided_slice %69 {offsets = [0, 32], sizes = [8, 32], strides = [1, 1]} : vector<8x64xf32> to vector<8x32xf32>
    %73 = arith.addf %71, %72 : vector<8x32xf32>
    %74 = arith.mulf %73, %73 : vector<8x32xf32>
    %75 = arith.mulf %73, %74 : vector<8x32xf32>
    %cst_30 = arith.constant 4.471500e-02 : f32
    %76 = vector.broadcast %cst_30 : f32 to vector<8x32xf32>
    %77 = arith.mulf %76, %75 : vector<8x32xf32>
    %78 = arith.addf %73, %77 : vector<8x32xf32>
    %cst_31 = arith.constant 0.797884583 : f32
    %79 = vector.broadcast %cst_31 : f32 to vector<8x32xf32>
    %80 = arith.mulf %79, %78 : vector<8x32xf32>
    %81 = math.tanh %80 : vector<8x32xf32>
    %cst_32 = arith.constant 1.000000e+00 : f32
    %82 = vector.broadcast %cst_32 : f32 to vector<8x32xf32>
    %83 = arith.addf %82, %81 : vector<8x32xf32>
    %cst_33 = arith.constant 5.000000e-01 : f32
    %84 = vector.broadcast %cst_33 : f32 to vector<8x32xf32>
    %85 = arith.mulf %84, %83 : vector<8x32xf32>
    %86 = arith.mulf %73, %85 : vector<8x32xf32>
    %87 = arith.truncf %86 : vector<8x32xf32> to vector<8x32xbf16>
    %88 = tpu.concatenate %67, %87 in 1 : vector<8x32xbf16>, vector<8x32xbf16> -> vector<8x64xbf16>
    %c0_34 = arith.constant 0 : index
    %c0_35 = arith.constant 0 : index
    %89 = vector.load %arg9[%c0_34, %c0_35] : memref<64x64xbf16, #tpu.memory_space<vmem>>, vector<64x64xbf16>
    %cst_36 = arith.constant dense<0.000000e+00> : vector<8x64xf32>
    %90 = tpu.matmul %88, %89, %cst_36 {dimension_numbers = #tpu.dot_dimension_numbers<[1], [0], [0], [1], [0, 0, 1, 1], [], []>} : vector<8x64xbf16>, vector<64x64xbf16>, vector<8x64xf32> -> vector<8x64xf32>
    %c0_37 = arith.constant 0 : index
    %c0_38 = arith.constant 0 : index
    %91 = vector.load %arg10[%c0_37, %c0_38] : memref<1x64xf32, #tpu.memory_space<vmem>>, vector<1x64xf32>
    %c0_39 = arith.constant 0 : index
    %c0_40 = arith.constant 0 : index
    %92 = vector.load %arg11[%c0_39, %c0_40] : memref<1x64xf32, #tpu.memory_space<vmem>>, vector<1x64xf32>
    %cst_41 = arith.constant dense<0.000000e+00> : vector<8xf32>
    %93 = vector.multi_reduction <add>, %90, %cst_41 [1] : vector<8x64xf32> to vector<8xf32>
    %94 = vector.shape_cast %93 : vector<8xf32> to vector<8x1xf32>
    %cst_42 = arith.constant 6.400000e+01 : f32
    %95 = vector.broadcast %cst_42 : f32 to vector<8x1xf32>
    %96 = arith.divf %94, %95 : vector<8x1xf32>
    %97 = vector.broadcast %96 : vector<8x1xf32> to vector<8x64xf32>
    %98 = arith.subf %90, %97 : vector<8x64xf32>
    %99 = arith.mulf %98, %98 : vector<8x64xf32>
    %cst_43 = arith.constant dense<0.000000e+00> : vector<8xf32>
    %100 = vector.multi_reduction <add>, %99, %cst_43 [1] : vector<8x64xf32> to vector<8xf32>
    %101 = vector.shape_cast %100 : vector<8xf32> to vector<8x1xf32>
    %cst_44 = arith.constant 6.400000e+01 : f32
    %102 = vector.broadcast %cst_44 : f32 to vector<8x1xf32>
    %103 = arith.divf %101, %102 : vector<8x1xf32>
    %cst_45 = arith.constant 9.99999974E-6 : f32
    %104 = vector.broadcast %cst_45 : f32 to vector<8x1xf32>
    %105 = arith.addf %103, %104 : vector<8x1xf32>
    %106 = math.rsqrt %105 : vector<8x1xf32>
    %107 = vector.broadcast %106 : vector<8x1xf32> to vector<8x64xf32>
    %108 = vector.broadcast %91 : vector<1x64xf32> to vector<8x64xf32>
    %109 = arith.mulf %107, %108 : vector<8x64xf32>
    %110 = arith.mulf %98, %109 : vector<8x64xf32>
    %111 = vector.broadcast %92 : vector<1x64xf32> to vector<8x64xf32>
    %112 = arith.addf %110, %111 : vector<8x64xf32>
    %c0_46 = arith.constant 0 : index
    %c0_47 = arith.constant 0 : index
    %113 = vector.load %arg12[%c0_46, %c0_47] : memref<8x64xf32, #tpu.memory_space<vmem>>, vector<8x64xf32>
    tpu.vector_store %arg12[%c0_46, %c0_47], %112 {strides = array<i32>} : memref<8x64xf32, #tpu.memory_space<vmem>>, vector<8x64xf32>,
    return
  }
  func.func @transform_0(%arg0: i32) -> (i32, i32) {
    %c0_i32 = arith.constant 0 : i32
    %c0_i32_0 = arith.constant 0 : i32
    return %arg0, %c0_i32 : i32, i32
  }
  func.func @transform_1(%arg0: i32) -> (i32, i32) {
    %c0_i32 = arith.constant 0 : i32
    %c0_i32_0 = arith.constant 0 : i32
    return %arg0, %c0_i32 : i32, i32
  }
  func.func @transform_2(%arg0: i32) -> (i32, i32) {
    %c0_i32 = arith.constant 0 : i32
    %c0_i32_0 = arith.constant 0 : i32
    %c0_i32_1 = arith.constant 0 : i32
    return %c0_i32, %c0_i32_0 : i32, i32
  }
  func.func @transform_3(%arg0: i32) -> (i32, i32) {
    %c0_i32 = arith.constant 0 : i32
    %c0_i32_0 = arith.constant 0 : i32
    %c0_i32_1 = arith.constant 0 : i32
    return %c0_i32, %c0_i32_0 : i32, i32
  }
  func.func @transform_4(%arg0: i32) -> (i32, i32) {
    %c0_i32 = arith.constant 0 : i32
    %c0_i32_0 = arith.constant 0 : i32
    %c0_i32_1 = arith.constant 0 : i32
    return %c0_i32, %c0_i32_0 : i32, i32
  }
  func.func @transform_5(%arg0: i32) -> (i32, i32) {
    %c0_i32 = arith.constant 0 : i32
    %c0_i32_0 = arith.constant 0 : i32
    %c0_i32_1 = arith.constant 0 : i32
    return %c0_i32, %c0_i32_0 : i32, i32
  }
  func.func @transform_6(%arg0: i32) -> (i32, i32) {
    %c0_i32 = arith.constant 0 : i32
    %c0_i32_0 = arith.constant 0 : i32
    %c0_i32_1 = arith.constant 0 : i32
    return %c0_i32, %c0_i32_0 : i32, i32
  }
  func.func @transform_7(%arg0: i32) -> (i32, i32) {
    %c0_i32 = arith.constant 0 : i32
    %c0_i32_0 = arith.constant 0 : i32
    %c0_i32_1 = arith.constant 0 : i32
    return %c0_i32, %c0_i32_0 : i32, i32
  }
  func.func @transform_8(%arg0: i32) -> (i32, i32) {
    %c0_i32 = arith.constant 0 : i32
    %c0_i32_0 = arith.constant 0 : i32
    %c0_i32_1 = arith.constant 0 : i32
    return %c0_i32, %c0_i32_0 : i32, i32
  }
  func.func @transform_9(%arg0: i32) -> (i32, i32) {
    %c0_i32 = arith.constant 0 : i32
    %c0_i32_0 = arith.constant 0 : i32
    %c0_i32_1 = arith.constant 0 : i32
    return %c0_i32, %c0_i32_0 : i32, i32
  }
  func.func @transform_10(%arg0: i32) -> (i32, i32) {
    %c0_i32 = arith.constant 0 : i32
    %c0_i32_0 = arith.constant 0 : i32
    %c0_i32_1 = arith.constant 0 : i32
    return %c0_i32, %c0_i32_0 : i32, i32
  }
  func.func @transform_11(%arg0: i32) -> (i32, i32) {
    %c0_i32 = arith.constant 0 : i32
    %c0_i32_0 = arith.constant 0 : i32
    return %arg0, %c0_i32 : i32, i32
  }
}

</mosaic_0001>

<llo_original>
// kernel: fwd.1
$region0: #{fwd.1}
  #allocation0 [shape = 'u32[]', space=smem, size = 0x4, offset = 0x4, fixed_abs, tag = 'smem constant byte address 0x4 - core index']
  #allocation1 [shape = 'u32[72,128]{1,0:T(1,128)}', space=vmem, size = 0x9000, scoped, tag = 'internal scratch']
  %s0 = inlined_call_operand.hbm [shape: f32[16,32], index: 0, kind: input, shape index: {}]
  %s1 = inlined_call_operand.hbm [shape: f32[16,32], index: 1, kind: input, shape index: {}]
  %s2 = inlined_call_operand.vmem [shape: f32[1,32], index: 2, kind: input, shape index: {}, may-alias: {2,4}]
  %s3 = inlined_call_operand.vmem [shape: f32[1,32], index: 3, kind: input, shape index: {}, may-alias: {3,5}]
  %s4 = inlined_call_operand.vmem [shape: f32[1,32], index: 4, kind: input, shape index: {}, may-alias: {2,4}]
  %s5 = inlined_call_operand.vmem [shape: f32[1,32], index: 5, kind: input, shape index: {}, may-alias: {3,5}]
  %s6 = inlined_call_operand.hbm [shape: bf16[32,64], index: 6, kind: input, shape index: {}]
  %s7 = inlined_call_operand.hbm [shape: bf16[32,64], index: 7, kind: input, shape index: {}]
  %s8 = inlined_call_operand.hbm [shape: bf16[64,64], index: 8, kind: input, shape index: {}]
  %s9 = inlined_call_operand.vmem [shape: f32[1,64], index: 9, kind: input, shape index: {}]
  %s10 = inlined_call_operand.vmem [shape: f32[1,64], index: 10, kind: input, shape index: {}]
  %s11 = inlined_call_operand.hbm [shape: f32[16,64], index: 11, kind: output, shape index: {}]
  %s12 = sld [smem:[#allocation0]]
  $region97: #{fwd.1} parent=0
    _
  %s14 = ssub.s32 1, %s12
  %s15 = scalar_select 0, %s14, %s12
  $region1: #{fwd.1} parent=0
    #allocation2 [shape = 'u8[8192]{0}', space=vmem, size = 0x2000, scoped, tag = 'input window, operand 0']
    #allocation3 [shape = 's32[2]{0}', space=sflag, size = 0x8, scoped, tag = 'scoped memory for fwd.1']
    #allocation4 [shape = 's32[2]{0}', space=sflag, size = 0x8, scoped, tag = 'scoped memory for fwd.1']
    #allocation5 [shape = 'u8[8192]{0}', space=vmem, size = 0x2000, scoped, tag = 'input window, operand 1']
    #allocation6 [shape = 's32[2]{0}', space=sflag, size = 0x8, scoped, tag = 'scoped memory for fwd.1']
    #allocation7 [shape = 'u8[8192]{0}', space=vmem, size = 0x2000, scoped, tag = 'input window, operand 6, single buffered']
    #allocation8 [shape = 'u8[8192]{0}', space=vmem, size = 0x2000, scoped, tag = 'input window, operand 7, single buffered']
    #allocation9 [shape = 's32[1]{0}', space=sflag, size = 0x4, scoped, tag = 'scoped memory for fwd.1']
    #allocation10 [shape = 'u8[16384]{0}', space=vmem, size = 0x4000, scoped, tag = 'input window, operand 8, single buffered']
    #allocation11 [shape = 'u8[8192]{0}', space=vmem, size = 0x2000, scoped, tag = 'output window, operand 0']
    %16 = vsyncpa [#allocation3], 0
    %s17 = scalar_lea.sflag [#allocation3], 1
    %18 = vsyncpa %s17, 0
    %19 = vsyncpa [#allocation6], 0
    %s20 = scalar_lea.sflag [#allocation6], 1
    %21 = vsyncpa %s20, 0
    %22 = vsyncpa [#allocation9], 0
    %23 = vsyncpa [#allocation4], 0
    %s24 = scalar_lea.sflag [#allocation4], 1
    %25 = vsyncpa %s24, 0
    loop: start=0, step=1, limit=4
    $region2: #{fwd.1} parent=1 // loop_pre_header
      _
    $region3: #{fwd.1} parent=1 // loop_header
      %s27 = sphi 0, %s31
      %p28 = scmp.ge.s32.totalorder %s27, 4
      %s37 = sphi 0, %s39
      %s40 = sphi 0, %s37
      %s41 = sphi 0, %s40
      %s57 = sphi 0, %s41
      %s63 = sphi 0, %s65
      %s66 = sphi 0, %s63
      %s67 = sphi 0, %s66
      %s83 = sphi 0, %s67
      %s87 = sphi 0, %s87
      %s89 = sphi 0, %s87
      %s90 = sphi 0, %s89
      %s104 = sphi 0, %s90
      %s108 = sphi 0, %s108
      %s110 = sphi 0, %s108
      %s111 = sphi 0, %s110
      %s125 = sphi 0, %s111
      %s129 = sphi 0, %s129
      %s131 = sphi 0, %s129
      %s132 = sphi 0, %s131
      %s146 = sphi 0, %s132
      %s150 = sphi 0, %s150
      %s152 = sphi 0, %s150
      %s153 = sphi 0, %s152
      %s167 = sphi 0, %s153
      %s171 = sphi 0, %s171
      %s173 = sphi 0, %s171
      %s174 = sphi 0, %s173
      %s188 = sphi 0, %s174
      %s192 = sphi 0, %s192
      %s194 = sphi 0, %s192
      %s195 = sphi 0, %s194
      %s209 = sphi 0, %s195
      %s213 = sphi 0, %s213
      %s215 = sphi 0, %s213
      %s216 = sphi 0, %s215
      %s230 = sphi 0, %s216
      %s234 = sphi 0, %s234
      %s236 = sphi 0, %s234
      %s237 = sphi 0, %s236
      %s251 = sphi 0, %s237
      %s255 = sphi 0, %s255
      %s257 = sphi 0, %s255
      %s258 = sphi 0, %s257
      %s272 = sphi 0, %s258
      %s278 = sphi 0, %s280
      %s281 = sphi 0, %s278
      %s282 = sphi 0, %s281
      %s298 = sphi 0, %s282
    $region4: #{fwd.1} parent=1 // loop_header_branch
      %30 = sbr.rel (%p28) target = $region8
    $region5: #{fwd.1} parent=1 // loop_body
      %s32 = ssub.s32 %s27, 1
      %s33 = ssub.s32 %s27, 2
      %s34 = sadd.s32 %s27, 1
      %s35 = ssub.s32 %s27, %s34
      %p36 = scmp.eq.s32.totalorder %s35, 0
      %s38 = sadd.s32 %s37, 1
      %s39 = scalar_select %p36, %s37, %s38
      %p42 = pneg %p36
      %p43 = scmp.eq.s32.totalorder %s27, 1
      %p44 = por %p42, %p43
      %p45 = scmp.ne.s32.totalorder %s37, %s40
      %p46 = scmp.eq.s32.totalorder %s27, 0
      %p47 = por %p45, %p46
      %p48 = scmp.ne.s32.totalorder %s37, %s40
      %p49 = scmp.eq.s32.totalorder %s32, 1
      %p50 = por %p48, %p49
      %p51 = scmp.ne.s32.totalorder %s40, %s41
      %p52 = scmp.eq.s32.totalorder %s32, 0
      %p53 = por %p51, %p52
      %p54 = scmp.ne.s32.totalorder %s40, %s41
      %p55 = scmp.eq.s32.totalorder %s33, 1
      %p56 = por %p54, %p55
      %p58 = scmp.ne.s32.totalorder %s41, %s57
      %p59 = scmp.eq.s32.totalorder %s33, 0
      %p60 = por %p58, %p59
      %s61 = ssub.s32 %s27, %s34
      %p62 = scmp.eq.s32.totalorder %s61, 0
      %s64 = sadd.s32 %s63, 1
      %s65 = scalar_select %p62, %s63, %s64
      %p68 = pneg %p62
      %p69 = scmp.eq.s32.totalorder %s27, 1
      %p70 = por %p68, %p69
      %p71 = scmp.ne.s32.totalorder %s63, %s66
      %p72 = scmp.eq.s32.totalorder %s27, 0
      %p73 = por %p71, %p72
      %p74 = scmp.ne.s32.totalorder %s63, %s66
      %p75 = scmp.eq.s32.totalorder %s32, 1
      %p76 = por %p74, %p75
      %p77 = scmp.ne.s32.totalorder %s66, %s67
      %p78 = scmp.eq.s32.totalorder %s32, 0
      %p79 = por %p77, %p78
      %p80 = scmp.ne.s32.totalorder %s66, %s67
      %p81 = scmp.eq.s32.totalorder %s33, 1
      %p82 = por %p80, %p81
      %p84 = scmp.ne.s32.totalorder %s67, %s83
      %p85 = scmp.eq.s32.totalorder %s33, 0
      %p86 = por %p84, %p85
      %s88 = sadd.s32 %s87, 1
      %p91 = scmp.eq.s32.totalorder %s27, 1
      %p92 = scmp.ne.s32.totalorder %s87, %s89
      %p93 = scmp.eq.s32.totalorder %s27, 0
      %p94 = por %p92, %p93
      %p95 = scmp.ne.s32.totalorder %s87, %s89
      %p96 = scmp.eq.s32.totalorder %s32, 1
      %p97 = por %p95, %p96
      %p98 = scmp.ne.s32.totalorder %s89, %s90
      %p99 = scmp.eq.s32.totalorder %s32, 0
      %p100 = por %p98, %p99
      %p101 = scmp.ne.s32.totalorder %s89, %s90
      %p102 = scmp.eq.s32.totalorder %s33, 1
      %p103 = por %p101, %p102
      %p105 = scmp.ne.s32.totalorder %s90, %s104
      %p106 = scmp.eq.s32.totalorder %s33, 0
      %p107 = por %p105, %p106
      %s109 = sadd.s32 %s108, 1
      %p112 = scmp.eq.s32.totalorder %s27, 1
      %p113 = scmp.ne.s32.totalorder %s108, %s110
      %p114 = scmp.eq.s32.totalorder %s27, 0
      %p115 = por %p113, %p114
      %p116 = scmp.ne.s32.totalorder %s108, %s110
      %p117 = scmp.eq.s32.totalorder %s32, 1
      %p118 = por %p116, %p117
      %p119 = scmp.ne.s32.totalorder %s110, %s111
      %p120 = scmp.eq.s32.totalorder %s32, 0
      %p121 = por %p119, %p120
      %p122 = scmp.ne.s32.totalorder %s110, %s111
      %p123 = scmp.eq.s32.totalorder %s33, 1
      %p124 = por %p122, %p123
      %p126 = scmp.ne.s32.totalorder %s111, %s125
      %p127 = scmp.eq.s32.totalorder %s33, 0
      %p128 = por %p126, %p127
      %s130 = sadd.s32 %s129, 1
      %p133 = scmp.eq.s32.totalorder %s27, 1
      %p134 = scmp.ne.s32.totalorder %s129, %s131
      %p135 = scmp.eq.s32.totalorder %s27, 0
      %p136 = por %p134, %p135
      %p137 = scmp.ne.s32.totalorder %s129, %s131
      %p138 = scmp.eq.s32.totalorder %s32, 1
      %p139 = por %p137, %p138
      %p140 = scmp.ne.s32.totalorder %s131, %s132
      %p141 = scmp.eq.s32.totalorder %s32, 0
      %p142 = por %p140, %p141
      %p143 = scmp.ne.s32.totalorder %s131, %s132
      %p144 = scmp.eq.s32.totalorder %s33, 1
      %p145 = por %p143, %p144
      %p147 = scmp.ne.s32.totalorder %s132, %s146
      %p148 = scmp.eq.s32.totalorder %s33, 0
      %p149 = por %p147, %p148
      %s151 = sadd.s32 %s150, 1
      %p154 = scmp.eq.s32.totalorder %s27, 1
      %p155 = scmp.ne.s32.totalorder %s150, %s152
      %p156 = scmp.eq.s32.totalorder %s27, 0
      %p157 = por %p155, %p156
      %p158 = scmp.ne.s32.totalorder %s150, %s152
      %p159 = scmp.eq.s32.totalorder %s32, 1
      %p160 = por %p158, %p159
      %p161 = scmp.ne.s32.totalorder %s152, %s153
      %p162 = scmp.eq.s32.totalorder %s32, 0
      %p163 = por %p161, %p162
      %p164 = scmp.ne.s32.totalorder %s152, %s153
      %p165 = scmp.eq.s32.totalorder %s33, 1
      %p166 = por %p164, %p165
      %p168 = scmp.ne.s32.totalorder %s153, %s167
      %p169 = scmp.eq.s32.totalorder %s33, 0
      %p170 = por %p168, %p169
      %s172 = sadd.s32 %s171, 1
      %p175 = scmp.eq.s32.totalorder %s27, 1
      %p176 = scmp.ne.s32.totalorder %s171, %s173
      %p177 = scmp.eq.s32.totalorder %s27, 0
      %p178 = por %p176, %p177
      %p179 = scmp.ne.s32.totalorder %s171, %s173
      %p180 = scmp.eq.s32.totalorder %s32, 1
      %p181 = por %p179, %p180
      %p182 = scmp.ne.s32.totalorder %s173, %s174
      %p183 = scmp.eq.s32.totalorder %s32, 0
      %p184 = por %p182, %p183
      %p185 = scmp.ne.s32.totalorder %s173, %s174
      %p186 = scmp.eq.s32.totalorder %s33, 1
      %p187 = por %p185, %p186
      %p189 = scmp.ne.s32.totalorder %s174, %s188
      %p190 = scmp.eq.s32.totalorder %s33, 0
      %p191 = por %p189, %p190
      %s193 = sadd.s32 %s192, 1
      %p196 = scmp.eq.s32.totalorder %s27, 1
      %p197 = scmp.ne.s32.totalorder %s192, %s194
      %p198 = scmp.eq.s32.totalorder %s27, 0
      %p199 = por %p197, %p198
      %p200 = scmp.ne.s32.totalorder %s192, %s194
      %p201 = scmp.eq.s32.totalorder %s32, 1
      %p202 = por %p200, %p201
      %p203 = scmp.ne.s32.totalorder %s194, %s195
      %p204 = scmp.eq.s32.totalorder %s32, 0
      %p205 = por %p203, %p204
      %p206 = scmp.ne.s32.totalorder %s194, %s195
      %p207 = scmp.eq.s32.totalorder %s33, 1
      %p208 = por %p206, %p207
      %p210 = scmp.ne.s32.totalorder %s195, %s209
      %p211 = scmp.eq.s32.totalorder %s33, 0
      %p212 = por %p210, %p211
      %s214 = sadd.s32 %s213, 1
      %p217 = scmp.eq.s32.totalorder %s27, 1
      %p218 = scmp.ne.s32.totalorder %s213, %s215
      %p219 = scmp.eq.s32.totalorder %s27, 0
      %p220 = por %p218, %p219
      %p221 = scmp.ne.s32.totalorder %s213, %s215
      %p222 = scmp.eq.s32.totalorder %s32, 1
      %p223 = por %p221, %p222
      %p224 = scmp.ne.s32.totalorder %s215, %s216
      %p225 = scmp.eq.s32.totalorder %s32, 0
      %p226 = por %p224, %p225
      %p227 = scmp.ne.s32.totalorder %s215, %s216
      %p228 = scmp.eq.s32.totalorder %s33, 1
      %p229 = por %p227, %p228
      %p231 = scmp.ne.s32.totalorder %s216, %s230
      %p232 = scmp.eq.s32.totalorder %s33, 0
      %p233 = por %p231, %p232
      %s235 = sadd.s32 %s234, 1
      %p238 = scmp.eq.s32.totalorder %s27, 1
      %p239 = scmp.ne.s32.totalorder %s234, %s236
      %p240 = scmp.eq.s32.totalorder %s27, 0
      %p241 = por %p239, %p240
      %p242 = scmp.ne.s32.totalorder %s234, %s236
      %p243 = scmp.eq.s32.totalorder %s32, 1
      %p244 = por %p242, %p243
      %p245 = scmp.ne.s32.totalorder %s236, %s237
      %p246 = scmp.eq.s32.totalorder %s32, 0
      %p247 = por %p245, %p246
      %p248 = scmp.ne.s32.totalorder %s236, %s237
      %p249 = scmp.eq.s32.totalorder %s33, 1
      %p250 = por %p248, %p249
      %p252 = scmp.ne.s32.totalorder %s237, %s251
      %p253 = scmp.eq.s32.totalorder %s33, 0
      %p254 = por %p252, %p253
      %s256 = sadd.s32 %s255, 1
      %p259 = scmp.eq.s32.totalorder %s27, 1
      %p260 = scmp.ne.s32.totalorder %s255, %s257
      %p261 = scmp.eq.s32.totalorder %s27, 0
      %p262 = por %p260, %p261
      %p263 = scmp.ne.s32.totalorder %s255, %s257
      %p264 = scmp.eq.s32.totalorder %s32, 1
      %p265 = por %p263, %p264
      %p266 = scmp.ne.s32.totalorder %s257, %s258
      %p267 = scmp.eq.s32.totalorder %s32, 0
      %p268 = por %p266, %p267
      %p269 = scmp.ne.s32.totalorder %s257, %s258
      %p270 = scmp.eq.s32.totalorder %s33, 1
      %p271 = por %p269, %p270
      %p273 = scmp.ne.s32.totalorder %s258, %s272
      %p274 = scmp.eq.s32.totalorder %s33, 0
      %p275 = por %p273, %p274
      %s276 = ssub.s32 %s27, %s34
      %p277 = scmp.eq.s32.totalorder %s276, 0
      %s279 = sadd.s32 %s278, 1
      %s280 = scalar_select %p277, %s278, %s279
      %p283 = pneg %p277
      %p284 = scmp.eq.s32.totalorder %s27, 1
      %p285 = por %p283, %p284
      %p286 = scmp.ne.s32.totalorder %s278, %s281
      %p287 = scmp.eq.s32.totalorder %s27, 0
      %p288 = por %p286, %p287
      %p289 = scmp.ne.s32.totalorder %s278, %s281
      %p290 = scmp.eq.s32.totalorder %s32, 1
      %p291 = por %p289, %p290
      %p292 = scmp.ne.s32.totalorder %s281, %s282
      %p293 = scmp.eq.s32.totalorder %s32, 0
      %p294 = por %p292, %p293
      %p295 = scmp.ne.s32.totalorder %s281, %s282
      %p296 = scmp.eq.s32.totalorder %s33, 1
      %p297 = por %p295, %p296
      %p299 = scmp.ne.s32.totalorder %s282, %s298
      %p300 = scmp.eq.s32.totalorder %s33, 0
      %p301 = por %p299, %p300
      %p302 = scmp.le.s32.totalorder 1, %s27
      %p303 = scmp.lt.s32.totalorder %s27, 3
      %p304 = pnand %p302, %p303
      %p305 = pneg %p304
      // Predicated region
      $region9: #{fwd.1} parent=5 // pred_check
        _
      $region10: #{fwd.1} parent=5 // pred_check_branch
        %307 = sbr.rel (%p304) target = $region12
      $region11: #{fwd.1} parent=5 // pred_region
        %s308 = ssub.s32 %s27, 1
        // Predicated region
        $region13: #{fwd.1} parent=11 // pred_check
          %p309 = pneg %p100
        $region14: #{fwd.1} parent=11 // pred_check_branch
          %311 = sbr.rel (%p309) target = $region16
        $region15: #{fwd.1} parent=11 // pred_region
          _
        $region16: #{fwd.1} parent=11 // pred_fallthru
          _
        // Predicated region
        $region17: #{fwd.1} parent=11 // pred_check
          %p312 = pneg %p121
        $region18: #{fwd.1} parent=11 // pred_check_branch
          %314 = sbr.rel (%p312) target = $region20
        $region19: #{fwd.1} parent=11 // pred_region
          _
        $region20: #{fwd.1} parent=11 // pred_fallthru
          _
        // Predicated region
        $region21: #{fwd.1} parent=11 // pred_check
          %p315 = pneg %p142
        $region22: #{fwd.1} parent=11 // pred_check_branch
          %317 = sbr.rel (%p315) target = $region24
        $region23: #{fwd.1} parent=11 // pred_region
          _
        $region24: #{fwd.1} parent=11 // pred_fallthru
          _
        // Predicated region
        $region25: #{fwd.1} parent=11 // pred_check
          %p318 = pneg %p163
        $region26: #{fwd.1} parent=11 // pred_check_branch
          %320 = sbr.rel (%p318) target = $region28
        $region27: #{fwd.1} parent=11 // pred_region
          _
        $region28: #{fwd.1} parent=11 // pred_fallthru
          _
        // Predicated region
        $region29: #{fwd.1} parent=11 // pred_check
          %p321 = pneg %p184
        $region30: #{fwd.1} parent=11 // pred_check_branch
          %323 = sbr.rel (%p321) target = $region32
        $region31: #{fwd.1} parent=11 // pred_region
          %325 = vsyncadd [#allocation6], 0
          %s326 = sshll.u32 %s6, 4
          %s327 = int_to_ptr.hbm [resolvable:$true] %s326
          %s328 = sshll.u32 [#allocation7], 4
          %s329 = int_to_ptr.vmem [resolvable:$true] %s328
          %334 = dma.hbm_to_vmem [thread:$0]  %s327, 256, %s329, [#allocation6], 64, 64, 4
        $region32: #{fwd.1} parent=11 // pred_fallthru
          _
        // Predicated region
        $region33: #{fwd.1} parent=11 // pred_check
          %p335 = pneg %p205
        $region34: #{fwd.1} parent=11 // pred_check_branch
          %337 = sbr.rel (%p335) target = $region36
        $region35: #{fwd.1} parent=11 // pred_region
          %339 = vsyncadd [#allocation9], 0
          %s340 = sshll.u32 %s7, 4
          %s341 = int_to_ptr.hbm [resolvable:$true] %s340
          %s342 = sshll.u32 [#allocation8], 4
          %s343 = int_to_ptr.vmem [resolvable:$true] %s342
          %348 = dma.hbm_to_vmem [thread:$0]  %s341, 256, %s343, [#allocation9], 64, 64, 4
        $region36: #{fwd.1} parent=11 // pred_fallthru
          _
        // Predicated region
        $region37: #{fwd.1} parent=11 // pred_check
          %p349 = pneg %p226
        $region38: #{fwd.1} parent=11 // pred_check_branch
          %351 = sbr.rel (%p349) target = $region40
        $region39: #{fwd.1} parent=11 // pred_region
          %353 = vsyncadd [#allocation9], 0
          %s354 = sshll.u32 %s8, 4
          %s355 = int_to_ptr.hbm [resolvable:$true] %s354
          %s356 = sshll.u32 [#allocation10], 4
          %s357 = int_to_ptr.vmem [resolvable:$true] %s356
          %362 = dma.hbm_to_vmem [thread:$0]  %s355, 512, %s357, [#allocation9], 64, 64, 4
        $region40: #{fwd.1} parent=11 // pred_fallthru
          _
        // Predicated region
        $region41: #{fwd.1} parent=11 // pred_check
          %p363 = pneg %p247
        $region42: #{fwd.1} parent=11 // pred_check_branch
          %365 = sbr.rel (%p363) target = $region44
        $region43: #{fwd.1} parent=11 // pred_region
          _
        $region44: #{fwd.1} parent=11 // pred_fallthru
          _
        // Predicated region
        $region45: #{fwd.1} parent=11 // pred_check
          %p366 = pneg %p268
        $region46: #{fwd.1} parent=11 // pred_check_branch
          %368 = sbr.rel (%p366) target = $region48
        $region47: #{fwd.1} parent=11 // pred_region
          _
        $region48: #{fwd.1} parent=11 // pred_fallthru
          _
      $region12: #{fwd.1} parent=5 // pred_fallthru
        _
      %p369 = scmp.lt.s32.totalorder %s27, 2
      // Predicated region
      $region49: #{fwd.1} parent=5 // pred_check
        %p370 = pneg %p369
      $region50: #{fwd.1} parent=5 // pred_check_branch
        %372 = sbr.rel (%p370) target = $region52
      $region51: #{fwd.1} parent=5 // pred_region
        // Predicated region
        $region53: #{fwd.1} parent=51 // pred_check
          %p373 = pneg %p47
        $region54: #{fwd.1} parent=51 // pred_check_branch
          %375 = sbr.rel (%p373) target = $region56
        $region55: #{fwd.1} parent=51 // pred_region
          %s376 = sand.u32 %s37, 1
          %s377 = scalar_lea.sflag [#allocation3], %s376
          %s378 = sand.u32 %s37, 1
          %s379 = smul.addr %s378, 8
          %s380 = scalar_lea.vmem [#allocation2], %s379
          %382 = vsyncadd %s377, 0
          %s383 = smul.addr %s27, 8
          %s384 = scalar_lea.hbm %s0, %s383
          %s386 = sshll.u32 %s384, 4
          %s387 = int_to_ptr.hbm [resolvable:$true] %s386
          %s388 = sshll.u32 %s380, 4
          %s389 = int_to_ptr.vmem [resolvable:$true] %s388
          %391 = dma.hbm_to_vmem [thread:$0]  %s387, 128, %s389, %s377
        $region56: #{fwd.1} parent=51 // pred_fallthru
          _
        // Predicated region
        $region57: #{fwd.1} parent=51 // pred_check
          %p392 = pneg %p73
        $region58: #{fwd.1} parent=51 // pred_check_branch
          %394 = sbr.rel (%p392) target = $region60
        $region59: #{fwd.1} parent=51 // pred_region
          %s395 = sand.u32 %s27, 1
          %s396 = scalar_lea.sflag [#allocation6], %s395
          %s397 = sand.u32 %s63, 1
          %s398 = smul.addr %s397, 8
          %s399 = scalar_lea.vmem [#allocation5], %s398
          %401 = vsyncadd %s396, 0
          %s402 = smul.addr %s27, 8
          %s403 = scalar_lea.hbm %s1, %s402
          %s405 = sshll.u32 %s403, 4
          %s406 = int_to_ptr.hbm [resolvable:$true] %s405
          %s407 = sshll.u32 %s399, 4
          %s408 = int_to_ptr.vmem [resolvable:$true] %s407
          %410 = dma.hbm_to_vmem [thread:$0]  %s406, 128, %s408, %s396
        $region60: #{fwd.1} parent=51 // pred_fallthru
          _
      $region52: #{fwd.1} parent=5 // pred_fallthru
        _
      %p411 = scmp.le.s32.totalorder 1, %s27
      %p412 = scmp.lt.s32.totalorder %s27, 3
      %p413 = pnand %p411, %p412
      %p414 = pneg %p413
      // Predicated region
      $region61: #{fwd.1} parent=5 // pred_check
        _
      $region62: #{fwd.1} parent=5 // pred_check_branch
        %416 = sbr.rel (%p413) target = $region64
      $region63: #{fwd.1} parent=5 // pred_region
        %s417 = ssub.s32 %s27, 1
        %s418 = sand.u32 %s40, 1
        %s419 = scalar_lea.sflag [#allocation3], %s418
        %s420 = sand.u32 %s40, 1
        %s421 = smul.addr %s420, 8
        %s422 = scalar_lea.vmem [#allocation2], %s421
        // Predicated region
        $region65: #{fwd.1} parent=63 // pred_check
          %p423 = pneg %p53
        $region66: #{fwd.1} parent=63 // pred_check_branch
          %425 = sbr.rel (%p423) target = $region68
        $region67: #{fwd.1} parent=63 // pred_region
          %427 = dma.done %s419, 128
        $region68: #{fwd.1} parent=63 // pred_fallthru
          _
        %s428 = sand.u32 %s32, 1
        %s429 = scalar_lea.sflag [#allocation6], %s428
        %s430 = sand.u32 %s66, 1
        %s431 = smul.addr %s430, 8
        %s432 = scalar_lea.vmem [#allocation5], %s431
        // Predicated region
        $region69: #{fwd.1} parent=63 // pred_check
          %p433 = pneg %p79
        $region70: #{fwd.1} parent=63 // pred_check_branch
          %435 = sbr.rel (%p433) target = $region72
        $region71: #{fwd.1} parent=63 // pred_region
          %437 = dma.done %s429, 128
        $region72: #{fwd.1} parent=63 // pred_fallthru
          _
        // Predicated region
        $region73: #{fwd.1} parent=63 // pred_check
          %p438 = pneg %p184
        $region74: #{fwd.1} parent=63 // pred_check_branch
          %440 = sbr.rel (%p438) target = $region76
        $region75: #{fwd.1} parent=63 // pred_region
          %442 = dma.done [#allocation6], 256
        $region76: #{fwd.1} parent=63 // pred_fallthru
          _
        // Predicated region
        $region77: #{fwd.1} parent=63 // pred_check
          %p443 = pneg %p205
        $region78: #{fwd.1} parent=63 // pred_check_branch
          %445 = sbr.rel (%p443) target = $region80
        $region79: #{fwd.1} parent=63 // pred_region
          %447 = dma.done [#allocation9], 256
        $region80: #{fwd.1} parent=63 // pred_fallthru
          _
        // Predicated region
        $region81: #{fwd.1} parent=63 // pred_check
          %p448 = pneg %p226
        $region82: #{fwd.1} parent=63 // pred_check_branch
          %450 = sbr.rel (%p448) target = $region84
        $region83: #{fwd.1} parent=63 // pred_region
          %452 = dma.done [#allocation9], 512
        $region84: #{fwd.1} parent=63 // pred_fallthru
          _
        %s453 = sand.u32 %s40, 1
        %s454 = scalar_lea.sflag [#allocation3], %s453
        %s455 = sand.u32 %s40, 1
        %s456 = smul.addr %s455, 8
        %s457 = scalar_lea.vmem [#allocation2], %s456
        %p458 = pneg %p53
        %p459 = pneg %p50
        %s460 = sand.u32 %s32, 1
        %s461 = scalar_lea.sflag [#allocation6], %s460
        %s462 = sand.u32 %s66, 1
        %s463 = smul.addr %s462, 8
        %s464 = scalar_lea.vmem [#allocation5], %s463
        %p465 = pneg %p79
        %p466 = pneg %p76
        %p467 = pneg %p100
        %p468 = pneg %p97
        %p469 = pneg %p121
        %p470 = pneg %p118
        %p471 = pneg %p142
        %p472 = pneg %p139
        %p473 = pneg %p163
        %p474 = pneg %p160
        %p475 = pneg %p184
        %p476 = pneg %p181
        %p477 = pneg %p205
        %p478 = pneg %p202
        %p479 = pneg %p226
        %p480 = pneg %p223
        %p481 = pneg %p247
        %p482 = pneg %p244
        %p483 = pneg %p268
        %p484 = pneg %p265
        %p485 = pneg %p294
        %p486 = pneg %p291
        %s487 = sand.u32 %s281, 1
        %s488 = scalar_lea.sflag [#allocation4], %s487
        %s489 = sand.u32 %s281, 1
        %s490 = smul.addr %s489, 8
        %s491 = scalar_lea.vmem [#allocation11], %s490
        %v493 = vld [vmem:[%s422] sm:$0xff]
        %v494 = vld [vmem:[%s2] sm:$0x1]
        %v495 = vld [vmem:[%s3] sm:$0x1]
        %vm496 = vcmask 261120
        %v497 = vsel %vm496, %v493, 0.0
        %498 = vadd.xlane.f32.xlu0 %v497
        %v499 = vpop.xlane.xlu0 %498
        %v500 = vrcp.pop 32.0
        %v501 = vmul.f32 32.0, %v500
        %v502 = vsub.f32 1.0, %v501
        %v503 = vmul.f32 %v500, %v502
        %v504 = vadd.f32 %v500, %v503
        %vm505 = vweird.f32 %v500
        %v506 = vsel %vm505, %v500, %v504
        %v507 = vmul.f32 %v499, %v506
        %v508 = vsub.f32 %v493, %v507
        %v509 = vmul.f32 %v508, %v508
        %v510 = vsel %vm496, %v509, 0.0
        %511 = vadd.xlane.f32.xlu0 %v510
        %v512 = vpop.xlane.xlu0 %511
        %v513 = vmul.f32 %v512, %v506
        %v514 = vadd.f32 %v513, 1e-05
        %v515 = vrsqrt.pop %v514
        %v516 = vmul.f32 %v515, %v514
        %v517 = vmul.f32 %v516, %v515
        %v518 = vmul.f32 0.5, %v517
        %v519 = vsub.f32 1.5, %v518
        %v520 = vmul.f32 %v515, %v519
        %vm521 = vweird.f32 %v514
        %vm522 = vweird.f32 %v515
        %vm523 = vmor %vm521, %vm522
        %v524 = vsel %vm523, %v515, %v520
        %v526 = vperm.slane %v494, 0
        %v528 = vmul.f32 %v524, %v526
        %v529 = vmul.f32 %v508, %v528
        %v531 = vperm.slane %v495, 0
        %v533 = vadd.f32 %v529, %v531
        %v534 = vld [vmem:[%s432] sm:$0xff]
        %v535 = vld [vmem:[%s4] sm:$0x1]
        %v536 = vld [vmem:[%s5] sm:$0x1]
        %v537 = vsel %vm496, %v534, 0.0
        %538 = vadd.xlane.f32.xlu0 %v537
        %v539 = vpop.xlane.xlu0 %538
        %v540 = vmul.f32 %v539, %v506
        %v541 = vsub.f32 %v534, %v540
        %v542 = vmul.f32 %v541, %v541
        %v543 = vsel %vm496, %v542, 0.0
        %544 = vadd.xlane.f32.xlu0 %v543
        %v545 = vpop.xlane.xlu0 %544
        %v546 = vmul.f32 %v545, %v506
        %v547 = vadd.f32 %v546, 1e-05
        %v548 = vrsqrt.pop %v547
        %v549 = vmul.f32 %v548, %v547
        %v550 = vmul.f32 %v549, %v548
        %v551 = vmul.f32 0.5, %v550
        %v552 = vsub.f32 1.5, %v551
        %v553 = vmul.f32 %v548, %v552
        %vm554 = vweird.f32 %v547
        %vm555 = vweird.f32 %v548
        %vm556 = vmor %vm554, %vm555
        %v557 = vsel %vm556, %v548, %v553
        %v559 = vperm.slane %v535, 0
        %v561 = vmul.f32 %v557, %v559
        %v562 = vmul.f32 %v541, %v561
        %v564 = vperm.slane %v536, 0
        %v566 = vadd.f32 %v562, %v564
        %v567 = vpack.c.bf16 %v533, %v533
        %v568 = vpack.c.bf16 %v566, %v566
        %v569 = vld [vmem:[#allocation7] sm:$0xf]
        %v570 = vld [vmem:[#allocation7 + $0x4] sm:$0xf]
        %v571 = vld [vmem:[#allocation7 + $0x8] sm:$0xf]
        %v572 = vld [vmem:[#allocation7 + $0xc] sm:$0xf]
        %v577 = vunpack.c.l.b16 %v569
        %v578 = vunpack.c.l.b16 %v570
        %v579 = vunpack.c.l.b16 %v571
        %v580 = vunpack.c.l.b16 %v572
        %v581 = vpack.c.b16 %v578, %v577
        %v582 = vpack.c.b16 %v580, %v579
        %v586 = vsel %vm496, %v568, 0
        %588 = vmatpush.bf16.msra.mxu0 0
        %589 = vmatpush.bf16.msra.mxu0 0
        %590 = vmatpush.bf16.msra.mxu0 0
        %591 = vmatpush.bf16.msra.mxu0 0
        %592 = vmatpush.bf16.msra.mxu0 0
        %593 = vmatpush.bf16.msra.mxu0 0
        %594 = vmatpush.bf16.msra.mxu0 %v582
        %595 = vmatpush.bf16.msra.mxu0 %v581
        %596 = vmatmul.bf16.gmra.mxu0 %v586
        %v597 = vpop.f32.mrf.mxu0
        %v598 = vadd.f32 0.0, %v597
        %v599 = vpop.f32.mrf.mxu0
        %600 = vdwg.mxu0
        %v601 = vmul.f32 %v598, %v533
        %603 = vrot.lane.b32.xlu0 %v598, 96
        %v604 = vpop.permute.xlu0 %603
        %v606 = vadd.f32 %v601, %v604
        %v607 = vmul.f32 %v606, %v606
        %v608 = vmul.f32 %v606, %v607
        %v609 = vmul.f32 %v608, 0.044715
        %v610 = vadd.f32 %v606, %v609
        %v611 = vmul.f32 %v610, 0.7978846
        %v612 = vtanh.pop %v611
        %v613 = vadd.f32 %v612, 1.0
        %v614 = vmul.f32 %v613, 0.5
        %v615 = vmul.f32 %v606, %v614
        %v616 = vpack.c.bf16 %v615, %v615
        %v617 = vld [vmem:[#allocation8] sm:$0xf]
        %v618 = vld [vmem:[#allocation8 + $0x4] sm:$0xf]
        %v619 = vld [vmem:[#allocation8 + $0x8] sm:$0xf]
        %v620 = vld [vmem:[#allocation8 + $0xc] sm:$0xf]
        %v625 = vunpack.c.l.b16 %v617
        %v626 = vunpack.c.l.b16 %v618
        %v627 = vunpack.c.l.b16 %v619
        %v628 = vunpack.c.l.b16 %v620
        %v629 = vpack.c.b16 %v626, %v625
        %v630 = vpack.c.b16 %v628, %v627
        %v634 = vsel %vm496, %v567, 0
        %636 = vmatpush.bf16.msra.mxu0 0
        %637 = vmatpush.bf16.msra.mxu0 0
        %638 = vmatpush.bf16.msra.mxu0 0
        %639 = vmatpush.bf16.msra.mxu0 0
        %640 = vmatpush.bf16.msra.mxu0 0
        %641 = vmatpush.bf16.msra.mxu0 0
        %642 = vmatpush.bf16.msra.mxu0 %v630
        %643 = vmatpush.bf16.msra.mxu0 %v629
        %644 = vmatmul.bf16.gmra.mxu0 %v634
        %v645 = vpop.f32.mrf.mxu0
        %v646 = vadd.f32 0.0, %v645
        %v647 = vpop.f32.mrf.mxu0
        %648 = vdwg.mxu0
        %v649 = vmul.f32 %v646, %v566
        %651 = vrot.lane.b32.xlu0 %v646, 96
        %v652 = vpop.permute.xlu0 %651
        %v654 = vadd.f32 %v649, %v652
        %v655 = vmul.f32 %v654, %v654
        %v656 = vmul.f32 %v654, %v655
        %v657 = vmul.f32 %v656, 0.044715
        %v658 = vadd.f32 %v654, %v657
        %v659 = vmul.f32 %v658, 0.7978846
        %v660 = vtanh.pop %v659
        %v661 = vadd.f32 %v660, 1.0
        %v662 = vmul.f32 %v661, 0.5
        %v663 = vmul.f32 %v654, %v662
        %v664 = vpack.c.bf16 %v663, %v663
        %v666 = vunpack.c.l.b16 %v664
        %v667 = vpack.c.b16 %v666, %v666
        %668 = vrot.lane.b32.xlu0 %v667, 32
        %v669 = vpop.permute.xlu0 %668
        %v672 = vsel %vm496, %v616, %v669
        %v673 = vld [vmem:[#allocation10] sm:$0xf]
        %v674 = vld [vmem:[#allocation10 + $0x4] sm:$0xf]
        %v675 = vld [vmem:[#allocation10 + $0x8] sm:$0xf]
        %v676 = vld [vmem:[#allocation10 + $0xc] sm:$0xf]
        %v677 = vld [vmem:[#allocation10 + $0x10] sm:$0xf]
        %v678 = vld [vmem:[#allocation10 + $0x14] sm:$0xf]
        %v679 = vld [vmem:[#allocation10 + $0x18] sm:$0xf]
        %v680 = vld [vmem:[#allocation10 + $0x1c] sm:$0xf]
        %v689 = vunpack.c.l.b16 %v673
        %v690 = vunpack.c.l.b16 %v674
        %v691 = vunpack.c.l.b16 %v675
        %v692 = vunpack.c.l.b16 %v676
        %v693 = vunpack.c.l.b16 %v677
        %v694 = vunpack.c.l.b16 %v678
        %v695 = vunpack.c.l.b16 %v679
        %v696 = vunpack.c.l.b16 %v680
        %v697 = vpack.c.b16 %v690, %v689
        %v698 = vpack.c.b16 %v692, %v691
        %v699 = vpack.c.b16 %v694, %v693
        %v700 = vpack.c.b16 %v696, %v695
        %vm705 = vcmask 523264
        %v706 = vsel %vm705, %v672, 0
        %708 = vmatpush.bf16.msra.mxu0 0
        %709 = vmatpush.bf16.msra.mxu0 0
        %710 = vmatpush.bf16.msra.mxu0 0
        %711 = vmatpush.bf16.msra.mxu0 0
        %712 = vmatpush.bf16.msra.mxu0 %v700
        %713 = vmatpush.bf16.msra.mxu0 %v699
        %714 = vmatpush.bf16.msra.mxu0 %v698
        %715 = vmatpush.bf16.msra.mxu0 %v697
        %716 = vmatmul.bf16.gmra.mxu0 %v706
        %v717 = vpop.f32.mrf.mxu0
        %v718 = vadd.f32 0.0, %v717
        %v719 = vpop.f32.mrf.mxu0
        %720 = vdwg.mxu0
        %v721 = vld [vmem:[%s9] sm:$0x1]
        %v722 = vld [vmem:[%s10] sm:$0x1]
        %v723 = vsel %vm705, %v718, 0.0
        %724 = vadd.xlane.f32.xlu0 %v723
        %v725 = vpop.xlane.xlu0 %724
        %v726 = vrcp.pop 64.0
        %v727 = vmul.f32 64.0, %v726
        %v728 = vsub.f32 1.0, %v727
        %v729 = vmul.f32 %v726, %v728
        %v730 = vadd.f32 %v726, %v729
        %vm731 = vweird.f32 %v726
        %v732 = vsel %vm731, %v726, %v730
        %v733 = vmul.f32 %v725, %v732
        %v734 = vsub.f32 %v718, %v733
        %v735 = vmul.f32 %v734, %v734
        %v736 = vsel %vm705, %v735, 0.0
        %737 = vadd.xlane.f32.xlu0 %v736
        %v738 = vpop.xlane.xlu0 %737
        %v739 = vmul.f32 %v738, %v732
        %v740 = vadd.f32 %v739, 1e-05
        %v741 = vrsqrt.pop %v740
        %v742 = vmul.f32 %v741, %v740
        %v743 = vmul.f32 %v742, %v741
        %v744 = vmul.f32 0.5, %v743
        %v745 = vsub.f32 1.5, %v744
        %v746 = vmul.f32 %v741, %v745
        %vm747 = vweird.f32 %v740
        %vm748 = vweird.f32 %v741
        %vm749 = vmor %vm747, %vm748
        %v750 = vsel %vm749, %v741, %v746
        %v752 = vperm.slane %v721, 0
        %v754 = vmul.f32 %v750, %v752
        %v755 = vmul.f32 %v734, %v754
        %v757 = vperm.slane %v722, 0
        %v759 = vadd.f32 %v755, %v757
        %760 = vst.msk [vmem:[%s491] sm:$0xff] %vm705, %v759
        %s761 = sand.u32 %s281, 1
        %s762 = scalar_lea.sflag [#allocation4], %s761
        %s763 = sand.u32 %s281, 1
        %s764 = smul.addr %s763, 8
        %s765 = scalar_lea.vmem [#allocation11], %s764
        // Predicated region
        $region85: #{fwd.1} parent=63 // pred_check
          %p766 = pneg %p291
        $region86: #{fwd.1} parent=63 // pred_check_branch
          %768 = sbr.rel (%p766) target = $region88
        $region87: #{fwd.1} parent=63 // pred_region
          %770 = vsyncadd %s762, 0
          %s771 = smul.addr %s32, 8
          %s772 = scalar_lea.hbm %s11, %s771
          %s774 = sshll.u32 %s765, 4
          %s775 = int_to_ptr.vmem [resolvable:$true] %s774
          %s776 = sshll.u32 %s772, 4
          %s777 = int_to_ptr.hbm [resolvable:$true] %s776
          %779 = dma.vmem_to_hbm [thread:$0]  %s775, 128, %s777, %s762
        $region88: #{fwd.1} parent=63 // pred_fallthru
          _
      $region64: #{fwd.1} parent=5 // pred_fallthru
        _
      %p780 = scmp.le.s32.totalorder 2, %s27
      // Predicated region
      $region89: #{fwd.1} parent=5 // pred_check
        %p781 = pneg %p780
      $region90: #{fwd.1} parent=5 // pred_check_branch
        %783 = sbr.rel (%p781) target = $region92
      $region91: #{fwd.1} parent=5 // pred_region
        %s784 = ssub.s32 %s27, 2
        // Predicated region
        $region93: #{fwd.1} parent=91 // pred_check
          %p785 = pneg %p297
        $region94: #{fwd.1} parent=91 // pred_check_branch
          %787 = sbr.rel (%p785) target = $region96
        $region95: #{fwd.1} parent=91 // pred_region
          %s788 = sand.u32 %s282, 1
          %s789 = scalar_lea.sflag [#allocation4], %s788
          %s790 = sand.u32 %s282, 1
          %s791 = smul.addr %s790, 8
          %s792 = scalar_lea.vmem [#allocation11], %s791
          %794 = dma.done %s789, 128
        $region96: #{fwd.1} parent=91 // pred_fallthru
          _
      $region92: #{fwd.1} parent=5 // pred_fallthru
        _
    $region6: #{fwd.1} parent=1 // loop_footer
      %s31 = sadd.s32 1, %s27
    $region7: #{fwd.1} parent=1 // loop_footer_branch
      %26 = sbr.rel target = $region3
    $region8: #{fwd.1} parent=1 // loop_exit
      _
    %795 = vsyncpa [#allocation3], 1
    %s796 = scalar_lea.sflag [#allocation3], 1
    %797 = vsyncpa %s796, 1
    %798 = vsyncpa [#allocation6], 1
    %s799 = scalar_lea.sflag [#allocation6], 1
    %800 = vsyncpa %s799, 1
    %801 = vsyncpa [#allocation9], 1
    %802 = vsyncpa [#allocation4], 1
    %s803 = scalar_lea.sflag [#allocation4], 1
    %804 = vsyncpa %s803, 1

</llo_original>
